<compile_context>
chip_gen: v7x
topology: tpu7x:2x2x1
jax: 0.10.0
libtpu: 0.0.40
codegen_flags: <defaults>
</compile_context>

<pallas_src>
import jax
import jax.numpy as jnp
from jax.experimental import pallas as pl
from jax.experimental.pallas import tpu as pltpu


# ----------------------------------------------------------------------------
# Kernel: fused GRUCell(h=0) + fused (fc1 @ fc2) projection.
# ----------------------------------------------------------------------------
def budget_kernel(
    x_ref,       # (B, D)      embedded items
    w_i3_ref,    # (D, 3H)     fused input-to-hidden weight, columns [r | z | n]
    b_i3_ref,    # (1, 3H)     fused bias: [b_ir+b_hr | b_iz+b_hz | b_in]
    b_hn_ref,    # (1, H)      hidden bias of the n-gate (multiplied by r)
    w_fc_ref,    # (H, budget) fused fc weight  (w1.T @ w2.T)
    b_fc_ref,    # (1, budget) fused fc bias    (b1 @ w2.T + b2)
    out_ref,     # (B, budget)
):
    H = b_hn_ref.shape[-1]

    x = x_ref[...]

    # Single MXU push for all three GRU input projections.
    g = jnp.dot(x, w_i3_ref[...], preferred_element_type=jnp.float32) + b_i3_ref[...]
    i_r = g[:, 0:H]
    i_z = g[:, H:2 * H]
    i_n = g[:, 2 * H:3 * H]

    # GRUCell with zero initial hidden state:
    #   r = sigmoid(W_ir x + b_ir + b_hr)
    #   z = sigmoid(W_iz x + b_iz + b_hz)
    #   n = tanh  (W_in x + b_in + r * b_hn)
    #   h' = (1 - z) * n
    r = jax.nn.sigmoid(i_r)
    z = jax.nn.sigmoid(i_z)
    n = jnp.tanh(i_n + r * b_hn_ref[...])
    h_new = (1.0 - z) * n

    # fc = Linear(H, H//2) ; Linear(H//2, budget), no activation in between,
    # collapsed offline into a single (H, budget) matmul.
    out = jnp.dot(h_new, w_fc_ref[...], preferred_element_type=jnp.float32) + b_fc_ref[...]
    out_ref[...] = out.astype(out_ref.dtype)


# ----------------------------------------------------------------------------
# Parameters (PyTorch layout) and one-time preparation / fusion.
# ----------------------------------------------------------------------------
def init_params(key, item_num, item_dim, budget_dim, gru_hidden_size):
    H, D, Hh = gru_hidden_size, item_dim, gru_hidden_size // 2
    ks = jax.random.split(key, 9)
    scale = 0.1
    return {
        "item_em": scale * jax.random.normal(ks[0], (item_num, D), jnp.float32),
        "w_ih":    scale * jax.random.normal(ks[1], (3 * H, D), jnp.float32),   # rows [r | z | n]
        "w_hh":    scale * jax.random.normal(ks[2], (3 * H, H), jnp.float32),
        "b_ih":    scale * jax.random.normal(ks[3], (3 * H,), jnp.float32),
        "b_hh":    scale * jax.random.normal(ks[4], (3 * H,), jnp.float32),
        "w1":      scale * jax.random.normal(ks[5], (Hh, H), jnp.float32),      # torch Linear: (out, in)
        "b1":      scale * jax.random.normal(ks[6], (Hh,), jnp.float32),
        "w2":      scale * jax.random.normal(ks[7], (budget_dim, Hh), jnp.float32),
        "b2":      scale * jax.random.normal(ks[8], (budget_dim,), jnp.float32),
    }


def prepare_params(params):
    """One-time weight preprocessing: all transposes / splits / fusions happen
    here, off the per-forward critical path.  The kernel then consumes exactly
    five small parameter arrays (+ the embedded inputs)."""
    H = params["w_hh"].shape[1]
    b_ih, b_hh = params["b_ih"], params["b_hh"]

    # Fused input-to-hidden weight: (D, 3H), column blocks ordered [r | z | n].
    w_i3 = params["w_ih"].T

    # Fused bias: r/z chunks absorb the hidden biases (h0 == 0); n keeps only b_in
    # because b_hn is gated by r inside the kernel.
    b_i3 = jnp.concatenate(
        [b_ih[0:H] + b_hh[0:H],
         b_ih[H:2 * H] + b_hh[H:2 * H],
         b_ih[2 * H:3 * H]]
    ).reshape(1, 3 * H)
    b_hn = b_hh[2 * H:3 * H].reshape(1, H)

    # Collapse the two bias-only Linear layers (no activation between them):
    #   out = (h @ w1.T + b1) @ w2.T + b2 = h @ (w1.T @ w2.T) + (b1 @ w2.T + b2)
    w_fc = params["w1"].T @ params["w2"].T                    # (H, budget_dim)
    b_fc = (params["b1"] @ params["w2"].T + params["b2"]).reshape(1, -1)

    # NOTE: at realistic sizes on v6e/v7x, cast w_i3 / w_fc (and x in the
    # forward) to bfloat16 here; f32 accumulation in the kernel keeps accuracy.
    return {
        "item_em": params["item_em"],
        "w_i3": w_i3, "b_i3": b_i3, "b_hn": b_hn,
        "w_fc": w_fc, "b_fc": b_fc,
    }


# ----------------------------------------------------------------------------
# Forward pass (steady state): embedding gather in JAX glue + one Pallas call.
# ----------------------------------------------------------------------------
def budget_net_forward(cur_item_id, prep):
    x = jnp.take(prep["item_em"], cur_item_id, axis=0).astype(jnp.float32)   # (B, D)
    B = x.shape[0]
    budget_dim = prep["w_fc"].shape[1]   # derived from the weights -> no mismatch possible

    operands = (x, prep["w_i3"], prep["b_i3"], prep["b_hn"], prep["w_fc"], prep["b_fc"])
    vmem_spec = pl.BlockSpec(memory_space=pltpu.MemorySpace.VMEM)

    # Total data is KB-scale: full-array VMEM blocks, no grid.
    # TODO(synk): for large batches, add grid=(B // tile_b,) over the batch dim with
    # dimension_semantics=("parallel",) to shard across v7x's two TensorCores.
    return pl.pallas_call(
        budget_kernel,
        out_shape=jax.ShapeDtypeStruct((B, budget_dim), jnp.float32),
        in_specs=[vmem_spec] * len(operands),
        out_specs=vmem_spec,
    )(*operands)


# ----------------------------------------------------------------------------
# Pure-JAX reference mirroring torch.nn.GRUCell (h0 = 0) + Sequential(Linear, Linear).
# ----------------------------------------------------------------------------
def budget_net_reference(cur_item_id, params):
    x = jnp.take(params["item_em"], cur_item_id, axis=0)
    H = params["w_hh"].shape[1]
    h = jnp.zeros((x.shape[0], H), jnp.float32)
    gi = x @ params["w_ih"].T + params["b_ih"]
    gh = h @ params["w_hh"].T + params["b_hh"]
    i_r, i_z, i_n = gi[:, :H], gi[:, H:2 * H], gi[:, 2 * H:]
    h_r, h_z, h_n = gh[:, :H], gh[:, H:2 * H], gh[:, 2 * H:]
    r = jax.nn.sigmoid(i_r + h_r)
    z = jax.nn.sigmoid(i_z + h_z)
    n = jnp.tanh(i_n + r * h_n)
    h_new = (1.0 - z) * n + z * h
    mid = h_new @ params["w1"].T + params["b1"]
    return mid @ params["w2"].T + params["b2"]


if __name__ == "__main__":
    item_num, item_dim, budget_dim, gru_hidden_size = 32, 16, 8, 32
    batch = 8

    key = jax.random.PRNGKey(0)
    k_params, k_ids = jax.random.split(key)
    params = init_params(k_params, item_num, item_dim, budget_dim, gru_hidden_size)
    cur_item_id = jax.random.randint(k_ids, (batch,), 0, item_num, dtype=jnp.int32)

    # One-time weight preparation (transposes / fusions hoisted out of the forward).
    prep = jax.tree_util.tree_map(jax.block_until_ready, prepare_params(params))

    forward = jax.jit(budget_net_forward)
    out = forward(cur_item_id, prep)
    out = jax.block_until_ready(out)

    ref = budget_net_reference(cur_item_id, params)
    assert out.shape == (batch, budget_dim)
    assert jnp.allclose(out, ref, atol=1e-5, rtol=1e-5)

    print("KERNEL_OK")
</pallas_src>

<mosaic_0001>
module attributes {stable_mosaic.version = 11 : i64} {
  func.func @budget_kernel(%arg0: memref<8x16xf32, #tpu.memory_space<vmem>>, %arg1: memref<16x96xf32, #tpu.memory_space<vmem>>, %arg2: memref<1x96xf32, #tpu.memory_space<vmem>>, %arg3: memref<1x32xf32, #tpu.memory_space<vmem>>, %arg4: memref<32x8xf32, #tpu.memory_space<vmem>>, %arg5: memref<1x8xf32, #tpu.memory_space<vmem>>, %arg6: memref<8x8xf32, #tpu.memory_space<vmem>>) attributes {dimension_semantics = [], scalar_prefetch = 0 : i64, scratch_operands = 0 : i64, tpu.core_type = #tpu.core_type<tc>} {
    %c0 = arith.constant 0 : index
    %c0_0 = arith.constant 0 : index
    %0 = vector.load %arg0[%c0, %c0_0] : memref<8x16xf32, #tpu.memory_space<vmem>>, vector<8x16xf32>
    %c0_1 = arith.constant 0 : index
    %c0_2 = arith.constant 0 : index
    %1 = vector.load %arg1[%c0_1, %c0_2] : memref<16x96xf32, #tpu.memory_space<vmem>>, vector<16x96xf32>
    %cst = arith.constant dense<0.000000e+00> : vector<8x96xf32>
    %2 = tpu.matmul %0, %1, %cst {dimension_numbers = #tpu.dot_dimension_numbers<[1], [0], [0], [1], [0, 0, 1, 1], [], []>} : vector<8x16xf32>, vector<16x96xf32>, vector<8x96xf32> -> vector<8x96xf32>
    %c0_3 = arith.constant 0 : index
    %c0_4 = arith.constant 0 : index
    %3 = vector.load %arg2[%c0_3, %c0_4] : memref<1x96xf32, #tpu.memory_space<vmem>>, vector<1x96xf32>
    %4 = vector.broadcast %3 : vector<1x96xf32> to vector<8x96xf32>
    %5 = arith.addf %2, %4 : vector<8x96xf32>
    %6 = vector.extract_strided_slice %5 {offsets = [0, 0], sizes = [8, 32], strides = [1, 1]} : vector<8x96xf32> to vector<8x32xf32>
    %7 = vector.extract_strided_slice %5 {offsets = [0, 32], sizes = [8, 32], strides = [1, 1]} : vector<8x96xf32> to vector<8x32xf32>
    %8 = vector.extract_strided_slice %5 {offsets = [0, 64], sizes = [8, 32], strides = [1, 1]} : vector<8x96xf32> to vector<8x32xf32>
    %9 = arith.negf %6 : vector<8x32xf32>
    %10 = math.exp %9 : vector<8x32xf32>
    %cst_5 = arith.constant 1.000000e+00 : f32
    %11 = vector.broadcast %cst_5 : f32 to vector<8x32xf32>
    %12 = arith.addf %11, %10 : vector<8x32xf32>
    %13 = arith.divf %11, %12 : vector<8x32xf32>
    %14 = arith.negf %7 : vector<8x32xf32>
    %15 = math.exp %14 : vector<8x32xf32>
    %cst_6 = arith.constant 1.000000e+00 : f32
    %16 = vector.broadcast %cst_6 : f32 to vector<8x32xf32>
    %17 = arith.addf %16, %15 : vector<8x32xf32>
    %18 = arith.divf %16, %17 : vector<8x32xf32>
    %c0_7 = arith.constant 0 : index
    %c0_8 = arith.constant 0 : index
    %19 = vector.load %arg3[%c0_7, %c0_8] : memref<1x32xf32, #tpu.memory_space<vmem>>, vector<1x32xf32>
    %20 = vector.broadcast %19 : vector<1x32xf32> to vector<8x32xf32>
    %21 = arith.mulf %13, %20 : vector<8x32xf32>
    %22 = arith.addf %8, %21 : vector<8x32xf32>
    %23 = math.tanh %22 : vector<8x32xf32>
    %cst_9 = arith.constant 1.000000e+00 : f32
    %24 = vector.broadcast %cst_9 : f32 to vector<8x32xf32>
    %25 = arith.subf %24, %18 : vector<8x32xf32>
    %26 = arith.mulf %25, %23 : vector<8x32xf32>
    %c0_10 = arith.constant 0 : index
    %c0_11 = arith.constant 0 : index
    %27 = vector.load %arg4[%c0_10, %c0_11] : memref<32x8xf32, #tpu.memory_space<vmem>>, vector<32x8xf32>
    %cst_12 = arith.constant dense<0.000000e+00> : vector<8x8xf32>
    %28 = tpu.matmul %26, %27, %cst_12 {dimension_numbers = #tpu.dot_dimension_numbers<[1], [0], [0], [1], [0, 0, 1, 1], [], []>} : vector<8x32xf32>, vector<32x8xf32>, vector<8x8xf32> -> vector<8x8xf32>
    %c0_13 = arith.constant 0 : index
    %c0_14 = arith.constant 0 : index
    %29 = vector.load %arg5[%c0_13, %c0_14] : memref<1x8xf32, #tpu.memory_space<vmem>>, vector<1x8xf32>
    %30 = vector.broadcast %29 : vector<1x8xf32> to vector<8x8xf32>
    %31 = arith.addf %28, %30 : vector<8x8xf32>
    %c0_15 = arith.constant 0 : index
    %c0_16 = arith.constant 0 : index
    %32 = vector.load %arg6[%c0_15, %c0_16] : memref<8x8xf32, #tpu.memory_space<vmem>>, vector<8x8xf32>
    tpu.vector_store %arg6[%c0_15, %c0_16], %31 {strides = array<i32>} : memref<8x8xf32, #tpu.memory_space<vmem>>, vector<8x8xf32>,
    return
  }
}

</mosaic_0001>

<llo_original>
// kernel: budget_net_forward.1
$region0: #{budget_net_forward.1}
  #allocation0 [shape = 'u32[]', space=smem, size = 0x4, offset = 0x4, fixed_abs, tag = 'smem constant byte address 0x4 - core index']
  #allocation1 [shape = 'u32[144,128]{1,0:T(1,128)}', space=vmem, size = 0x12000, scoped, tag = 'internal scratch']
  %s0 = inlined_call_operand.vmem [shape: f32[8,16], index: 0, kind: input, shape index: {}]
  %s1 = inlined_call_operand.vmem [shape: f32[16,96], index: 1, kind: input, shape index: {}]
  %s2 = inlined_call_operand.vmem [shape: f32[1,96], index: 2, kind: input, shape index: {}]
  %s3 = inlined_call_operand.vmem [shape: f32[1,32], index: 3, kind: input, shape index: {}]
  %s4 = inlined_call_operand.vmem [shape: f32[32,8], index: 4, kind: input, shape index: {}]
  %s5 = inlined_call_operand.vmem [shape: f32[1,8], index: 5, kind: input, shape index: {}]
  %s6 = inlined_call_operand.hbm [shape: f32[8,8], index: 6, kind: output, shape index: {}]
  %s7 = sld [smem:[#allocation0]]
  $region34: #{budget_net_forward.1} parent=0
    _
  %s9 = ssub.s32 1, %s7
  %s10 = scalar_select 0, %s9, %s7
  $region1: #{budget_net_forward.1} parent=0
    #allocation2 [shape = 'u8[4096]{0}', space=vmem, size = 0x1000, scoped, tag = 'output window, operand 0, single buffered']
    #allocation3 [shape = 's32[1]{0}', space=sflag, size = 0x4, scoped, tag = 'scoped memory for budget_net_forward.1']
    %11 = vsyncpa [#allocation3], 0
    // Predicated region
    $region2: #{budget_net_forward.1} parent=1 // pred_check
      _
    $region3: #{budget_net_forward.1} parent=1 // pred_check_branch
      %13 = sbr.rel (0) target = $region5
    $region4: #{budget_net_forward.1} parent=1 // pred_region
      _
    $region5: #{budget_net_forward.1} parent=1 // pred_fallthru
      _
    // Predicated region
    $region6: #{budget_net_forward.1} parent=1 // pred_check
      _
    $region7: #{budget_net_forward.1} parent=1 // pred_check_branch
      %15 = sbr.rel (0) target = $region9
    $region8: #{budget_net_forward.1} parent=1 // pred_region
      _
    $region9: #{budget_net_forward.1} parent=1 // pred_fallthru
      _
    // Predicated region
    $region10: #{budget_net_forward.1} parent=1 // pred_check
      _
    $region11: #{budget_net_forward.1} parent=1 // pred_check_branch
      %17 = sbr.rel (0) target = $region13
    $region12: #{budget_net_forward.1} parent=1 // pred_region
      _
    $region13: #{budget_net_forward.1} parent=1 // pred_fallthru
      _
    // Predicated region
    $region14: #{budget_net_forward.1} parent=1 // pred_check
      _
    $region15: #{budget_net_forward.1} parent=1 // pred_check_branch
      %19 = sbr.rel (0) target = $region17
    $region16: #{budget_net_forward.1} parent=1 // pred_region
      _
    $region17: #{budget_net_forward.1} parent=1 // pred_fallthru
      _
    // Predicated region
    $region18: #{budget_net_forward.1} parent=1 // pred_check
      _
    $region19: #{budget_net_forward.1} parent=1 // pred_check_branch
      %21 = sbr.rel (0) target = $region21
    $region20: #{budget_net_forward.1} parent=1 // pred_region
      _
    $region21: #{budget_net_forward.1} parent=1 // pred_fallthru
      _
    // Predicated region
    $region22: #{budget_net_forward.1} parent=1 // pred_check
      _
    $region23: #{budget_net_forward.1} parent=1 // pred_check_branch
      %23 = sbr.rel (0) target = $region25
    $region24: #{budget_net_forward.1} parent=1 // pred_region
      _
    $region25: #{budget_net_forward.1} parent=1 // pred_fallthru
      _
    %v24 = vld [vmem:[%s0] sm:$0xff]
    %v25 = vld [vmem:[%s1] sm:$0xff]
    %v26 = vld [vmem:[%s1 + $0x8] sm:$0xff]
    %v27 = vld [vmem:[%s2] sm:$0x1]
    %v29 = vlaneseq
    %v30 = vshrl.u32 %v29, 7
    %v31 = vsub.s32 0, %v30
    %v32 = vrot.slane %v27, %v31
    %vm34 = vcmask 130048
    %v36 = vsel %vm34, %v24, 0
    %38 = vmatprep.subr.mxu0 0.0
    %39 = vmatpush1.msra.mxu0 %v25
    %40 = vmatprep.subr.mxu0 0.0
    %41 = vmatpush1.msra.mxu0 %v26
    %42 = vmatprep.subr.mxu0 0.0
    %43 = vmatpush1.msra.mxu0 0.0
    %44 = vmatprep.subr.mxu0 0.0
    %45 = vmatpush1.msra.mxu0 0.0
    %46 = vmatprep.subr.mxu0 0.0
    %47 = vmatpush1.msra.mxu0 0.0
    %48 = vmatprep.subr.mxu0 0.0
    %49 = vmatpush1.msra.mxu0 0.0
    %50 = vmatprep.subr.mxu0 0.0
    %51 = vmatpush1.msra.mxu0 0.0
    %52 = vmatprep.subr.mxu0 0.0
    %53 = vmatpush1.msra.mxu0 0.0
    %54 = vmatprep.subr.mxu0 0.0
    %55 = vmatpush1.msra.mxu0 0.0
    %56 = vmatprep.subr.mxu0 0.0
    %57 = vmatpush1.msra.mxu0 0.0
    %58 = vmatprep.subr.mxu0 0.0
    %59 = vmatpush1.msra.mxu0 0.0
    %60 = vmatprep.subr.mxu0 0.0
    %61 = vmatpush1.msra.mxu0 0.0
    %62 = vmatprep.subr.mxu0 0.0
    %63 = vmatpush1.msra.mxu0 0.0
    %64 = vmatprep.subr.mxu0 0.0
    %65 = vmatpush1.msra.mxu0 0.0
    %66 = vmatprep.subr.mxu0 0.0
    %67 = vmatpush1.msra.mxu0 0.0
    %68 = vmatprep.subr.mxu0 0.0
    %69 = vmatpush1.msra.mxu0 0.0
    %70 = vmatprep.subr.mxu0 0.0
    %71 = vmatpush1.msra.mxu0 0.0
    %72 = vmatprep.subr.mxu0 0.0
    %73 = vmatpush1.msra.mxu0 0.0
    %74 = vmatprep.subr.mxu0 0.0
    %75 = vmatpush1.msra.mxu0 0.0
    %76 = vmatprep.subr.mxu0 0.0
    %77 = vmatpush1.msra.mxu0 0.0
    %78 = vmatprep.subr.mxu0 0.0
    %79 = vmatpush1.msra.mxu0 0.0
    %80 = vmatprep.subr.mxu0 0.0
    %81 = vmatpush1.msra.mxu0 0.0
    %82 = vmatprep.subr.mxu0 0.0
    %83 = vmatpush1.msra.mxu0 0.0
    %84 = vmatprep.subr.mxu0 0.0
    %85 = vmatpush1.msra.mxu0 0.0
    %86 = vmatprep.subr.mxu0 0.0
    %87 = vmatpush1.msra.mxu0 0.0
    %88 = vmatprep.subr.mxu0 0.0
    %89 = vmatpush1.msra.mxu0 0.0
    %90 = vmatprep.subr.mxu0 0.0
    %91 = vmatpush1.msra.mxu0 0.0
    %92 = vmatprep.subr.mxu0 0.0
    %93 = vmatpush1.msra.mxu0 0.0
    %94 = vmatprep.subr.mxu0 0.0
    %95 = vmatpush1.msra.mxu0 0.0
    %96 = vmatprep.subr.mxu0 0.0
    %97 = vmatpush1.msra.mxu0 0.0
    %98 = vmatprep.subr.mxu0 0.0
    %99 = vmatpush1.msra.mxu0 0.0
    %100 = vmatprep.subr.mxu0 0.0
    %101 = vmatpush1.msra.mxu0 0.0
    %102 = vmatprep.mubr.f32.mxu0 0.0
    %103 = vmatmul.mubr.f32.gmra.mrb[0].mxu0 %v36
    %v104 = vpop.f32.mrb[0].mxu0
    %v105 = vadd.f32 %v32, %v104
    %v106 = vpop.f32.mrb[0].mxu0
    %107 = vdwg.mxu0
    %v108 = vxor.u32 %v105, 2147483648
    %v109 = vmul.f32 %v108, 1.442695
    %v110 = vpow.pop %v109
    %v111 = vadd.f32 %v110, 1.0
    %v112 = vrcp.pop %v111
    %v113 = vmul.f32 1.0, %v112
    %v114 = vld [vmem:[%s3] sm:$0x1]
    %v116 = vlaneseq
    %v117 = vshrl.u32 %v116, 7
    %v118 = vsub.s32 0, %v117
    %v119 = vrot.slane %v114, %v118
    %v121 = vmul.f32 %v113, %v119
    %123 = vrot.lane.b32.xlu0 %v121, 64
    %v124 = vpop.permute.xlu0 %123
    %v126 = vadd.f32 %v105, %v124
    %v127 = vtanh.pop %v126
    %v128 = vsub.f32 1.0, %v113
    %130 = vrot.lane.b32.xlu0 %v127, 96
    %v131 = vpop.permute.xlu0 %130
    %v133 = vmul.f32 %v128, %v131
    %v134 = vld [vmem:[%s4] sm:$0xff]
    %v135 = vld [vmem:[%s4 + $0x8] sm:$0xff]
    %v136 = vld [vmem:[%s4 + $0x10] sm:$0xff]
    %v137 = vld [vmem:[%s4 + $0x18] sm:$0xff]
    %v138 = vld [vmem:[%s5] sm:$0x1]
    %v140 = vlaneseq
    %v141 = vshrl.u32 %v140, 7
    %v142 = vsub.s32 0, %v141
    %v143 = vrot.slane %v138, %v142
    %146 = vrot.lane.b32.xlu0 %v133, 96
    %v147 = vpop.permute.xlu0 %146
    %vm148 = vcmask 261120
    %v149 = vsel %vm148, %v147, 0
    %151 = vmatprep.subr.mxu0 0.0
    %152 = vmatpush1.msra.mxu0 %v134
    %153 = vmatprep.subr.mxu0 0.0
    %154 = vmatpush1.msra.mxu0 %v135
    %155 = vmatprep.subr.mxu0 0.0
    %156 = vmatpush1.msra.mxu0 %v136
    %157 = vmatprep.subr.mxu0 0.0
    %158 = vmatpush1.msra.mxu0 %v137
    %159 = vmatprep.subr.mxu0 0.0
    %160 = vmatpush1.msra.mxu0 0.0
    %161 = vmatprep.subr.mxu0 0.0
    %162 = vmatpush1.msra.mxu0 0.0
    %163 = vmatprep.subr.mxu0 0.0
    %164 = vmatpush1.msra.mxu0 0.0
    %165 = vmatprep.subr.mxu0 0.0
    %166 = vmatpush1.msra.mxu0 0.0
    %167 = vmatprep.subr.mxu0 0.0
    %168 = vmatpush1.msra.mxu0 0.0
    %169 = vmatprep.subr.mxu0 0.0
    %170 = vmatpush1.msra.mxu0 0.0
    %171 = vmatprep.subr.mxu0 0.0
    %172 = vmatpush1.msra.mxu0 0.0
    %173 = vmatprep.subr.mxu0 0.0
    %174 = vmatpush1.msra.mxu0 0.0
    %175 = vmatprep.subr.mxu0 0.0
    %176 = vmatpush1.msra.mxu0 0.0
    %177 = vmatprep.subr.mxu0 0.0
    %178 = vmatpush1.msra.mxu0 0.0
    %179 = vmatprep.subr.mxu0 0.0
    %180 = vmatpush1.msra.mxu0 0.0
    %181 = vmatprep.subr.mxu0 0.0
    %182 = vmatpush1.msra.mxu0 0.0
    %183 = vmatprep.subr.mxu0 0.0
    %184 = vmatpush1.msra.mxu0 0.0
    %185 = vmatprep.subr.mxu0 0.0
    %186 = vmatpush1.msra.mxu0 0.0
    %187 = vmatprep.subr.mxu0 0.0
    %188 = vmatpush1.msra.mxu0 0.0
    %189 = vmatprep.subr.mxu0 0.0
    %190 = vmatpush1.msra.mxu0 0.0
    %191 = vmatprep.subr.mxu0 0.0
    %192 = vmatpush1.msra.mxu0 0.0
    %193 = vmatprep.subr.mxu0 0.0
    %194 = vmatpush1.msra.mxu0 0.0
    %195 = vmatprep.subr.mxu0 0.0
    %196 = vmatpush1.msra.mxu0 0.0
    %197 = vmatprep.subr.mxu0 0.0
    %198 = vmatpush1.msra.mxu0 0.0
    %199 = vmatprep.subr.mxu0 0.0
    %200 = vmatpush1.msra.mxu0 0.0
    %201 = vmatprep.subr.mxu0 0.0
    %202 = vmatpush1.msra.mxu0 0.0
    %203 = vmatprep.subr.mxu0 0.0
    %204 = vmatpush1.msra.mxu0 0.0
    %205 = vmatprep.subr.mxu0 0.0
    %206 = vmatpush1.msra.mxu0 0.0
    %207 = vmatprep.subr.mxu0 0.0
    %208 = vmatpush1.msra.mxu0 0.0
    %209 = vmatprep.subr.mxu0 0.0
    %210 = vmatpush1.msra.mxu0 0.0
    %211 = vmatprep.subr.mxu0 0.0
    %212 = vmatpush1.msra.mxu0 0.0
    %213 = vmatprep.subr.mxu0 0.0
    %214 = vmatpush1.msra.mxu0 0.0
    %215 = vmatprep.mubr.f32.mxu0 0.0
    %216 = vmatmul.mubr.f32.gmra.mrb[0].mxu0 %v149
    %v217 = vpop.f32.mrb[0].mxu0
    %v218 = vadd.f32 %v143, %v217
    %v219 = vpop.f32.mrb[0].mxu0
    %220 = vdwg.mxu0
    %vm221 = vcmask 64512
    %222 = vst.msk [vmem:[#allocation2] sm:$0xff] %vm221, %v218
    // Predicated region
    $region26: #{budget_net_forward.1} parent=1 // pred_check
      _
    $region27: #{budget_net_forward.1} parent=1 // pred_check_branch
      %224 = sbr.rel (0) target = $region29
    $region28: #{budget_net_forward.1} parent=1 // pred_region
      %s226 = ssub.s32 128, 128
      %227 = vsyncadd [#allocation3], %s226
      %s229 = sshll.u32 [#allocation2], 4
      %s230 = int_to_ptr.vmem [resolvable:$true] %s229
      %232 = dma.vmem_to_hbm [thread:$0]  %s230, 128, %s6, [#allocation3]
    $region29: #{budget_net_forward.1} parent=1 // pred_fallthru
      _
    // Predicated region
    $region30: #{budget_net_forward.1} parent=1 // pred_check
      _
    $region31: #{budget_net_forward.1} parent=1 // pred_check_branch
      %234 = sbr.rel (0) target = $region33
    $region32: #{budget_net_forward.1} parent=1 // pred_region
      %235 = dma.done [#allocation3], 128
    $region33: #{budget_net_forward.1} parent=1 // pred_fallthru
      _
    %236 = vsyncpa [#allocation3], 1

</llo_original>
